<compile_context>
chip_gen: v6e
topology: v6e:2x2x1
jax: 0.10.0
libtpu: 0.0.40
codegen_flags: <defaults>
</compile_context>

<pallas_src>
import functools

import jax
import jax.numpy as jnp
from jax import lax
from jax.experimental import pallas as pl
from jax.experimental.pallas import tpu as pltpu


def _round_up(x, m):
    return ((x + m - 1) // m) * m


def _device_kind():
    try:
        return jax.devices()[0].device_kind.lower()
    except Exception:
        return ""


def _vmem_capacity_bytes():
    try:
        cap = getattr(pltpu.get_tpu_info(), "vmem_capacity_bytes", None)
        if cap:
            return int(cap)
    except Exception:
        pass
    kind = _device_kind()
    return (64 << 20) if ("v7" in kind or "7x" in kind) else (128 << 20)


def _vmem_footprint(bb, res_p, tngh, att_p, hid_bytes, resident):
    """Approximate VMEM bytes for one kernel instance."""
    bf16, f32 = 2, 4
    w_bufs = 1 if resident else 2  # Buffered(1) when the weight block is grid-constant
    weights = w_bufs * (res_p * tngh * bf16 + tngh * att_p * bf16 + tngh * f32) + att_p * f32
    tiles = 2 * bb * (res_p * f32 + tngh * hid_bytes + att_p * f32)  # double-buffered streams
    return weights + tiles


def _attdec_kernel(feat_ref, w1_ref, b1_ref, w2_ref, b2_ref, out_ref, hid_ref, *, nj):
    # fc1 on this ngh tile: bf16 x bf16 on the MXU, f32 accumulate.
    x = feat_ref[...].astype(w1_ref.dtype)          # VPU cast; feat stays f32 in HBM
    h = jnp.dot(x, w1_ref[...], preferred_element_type=jnp.float32)
    h = h + b1_ref[...]                             # bias add in f32
    h = jnp.where(h > 0, h, 0.2 * h)                # LeakyReLU(0.2)

    # hidden (getLayersOutDet). bf16 store by default halves writeback bytes;
    # the same cast feeds the second MXU pass.
    h_mm = h.astype(w2_ref.dtype)
    if hid_ref.dtype == h.dtype:
        hid_ref[...] = h
    else:
        hid_ref[...] = h_mm.astype(hid_ref.dtype)

    if nj == 1:
        # Fully weight-resident path: single fc3 matmul + normalize.
        o = jnp.dot(h_mm, w2_ref[...], preferred_element_type=jnp.float32) + b2_ref[...]
        ss = jnp.sum(o * o, axis=1, keepdims=True)
        out_ref[...] = o * lax.rsqrt(ss)            # rsqrt on the EUP; no eps (matches reference)
    else:
        # ngh-tiled path: accumulate fc3 into the resident f32 output block.
        j = pl.program_id(1)

        @pl.when(j == 0)
        def _():
            out_ref[...] = jnp.zeros_like(out_ref)

        out_ref[...] += jnp.dot(h_mm, w2_ref[...], preferred_element_type=jnp.float32)

        @pl.when(j == nj - 1)
        def _():
            o = out_ref[...] + b2_ref[...]
            ss = jnp.sum(o * o, axis=1, keepdims=True)
            out_ref[...] = o * lax.rsqrt(ss)


def attdec_prepack(w1, b1, w2, b2):
    """One-time pad (to multiples of 128) + bf16 cast of the weights.

    w1: [resSize, ngh], b1: [ngh] or [1, ngh]; w2: [ngh, attSize], b2: [attSize] or [1, attSize].
    Weights are stored [in, out] (transpose of PyTorch nn.Linear.weight).
    Returns (w1p, b1p, w2p, b2p, dims) with dims = (ngh, attSize).
    Call once and reuse; the hot path never re-pads / re-casts weights.
    """
    res, ngh = w1.shape
    att = w2.shape[1]
    res_p = _round_up(res, 128)
    ngh_p = _round_up(ngh, 128)
    att_p = _round_up(att, 128)
    w1p = jnp.pad(w1, ((0, res_p - res), (0, ngh_p - ngh))).astype(jnp.bfloat16)
    b1p = jnp.pad(jnp.reshape(b1, (1, -1)), ((0, 0), (0, ngh_p - ngh))).astype(jnp.float32)
    w2p = jnp.pad(w2, ((0, ngh_p - ngh), (0, att_p - att))).astype(jnp.bfloat16)
    b2p = jnp.pad(jnp.reshape(b2, (1, -1)), ((0, 0), (0, att_p - att))).astype(jnp.float32)
    return w1p, b1p, w2p, b2p, (ngh, att)


@functools.partial(jax.jit, static_argnames=("dims", "block_b", "hidden_dtype"))
def attdec_forward(feat, w1p, b1p, w2p, b2p, *, dims, block_b=None,
                   hidden_dtype=jnp.bfloat16):
    """feat: [B, resSize] float32 (unpadded). w1p/b1p/w2p/b2p from attdec_prepack.
    dims = (ngh, attSize) original sizes (static).
    Returns (out [B, attSize] float32 L2-normalized, hidden [B, ngh] hidden_dtype)."""
    B, res = feat.shape
    ngh, att = dims
    res_p, ngh_p = w1p.shape
    att_p = w2p.shape[1]

    kind = _device_kind()
    if block_b is None:
        block_b = 128 if "v5" in kind else 256      # 128 already fills v5e's 4x128 MXU

    # Batch tile: multiple of 16 (bf16 sublane packing), capped at block_b.
    bb = min(block_b, _round_up(max(B, 16), 16))
    # v7x: 2 TensorCores per chip; the "parallel" batch axis shards across them,
    # so keep >= 2 batch tiles whenever the batch allows it.
    if ("v7" in kind or "7x" in kind) and B >= 32 and _round_up(B, bb) // bb < 2:
        bb = _round_up(-(-B // 2), 16)
    b_p = _round_up(B, bb)

    hid_bytes = jnp.dtype(hidden_dtype).itemsize
    vmem_cap = _vmem_capacity_bytes()
    vmem_target = vmem_cap - (8 << 20)              # leave compiler headroom

    # Weight residency when it fits; otherwise tile ngh as a reduction axis.
    nj, tngh = 1, ngh_p
    while _vmem_footprint(bb, res_p, tngh, att_p, hid_bytes, nj == 1) > vmem_target and tngh > 128:
        nj *= 2
        tngh = _round_up(-(-ngh_p // nj), 128)
    ngh_pp = nj * tngh
    if ngh_pp != ngh_p:                             # rare large-ngh case: re-pad to a tile multiple
        w1p = jnp.pad(w1p, ((0, 0), (0, ngh_pp - ngh_p)))
        b1p = jnp.pad(b1p, ((0, 0), (0, ngh_pp - ngh_p)))
        w2p = jnp.pad(w2p, ((0, ngh_pp - ngh_p), (0, 0)))

    # Pad feat (batch -> b_p, features -> res_p) only when actually needed.
    # No dtype cast here: the bf16 cast happens inside the kernel.
    if b_p != B or res_p != res:
        feat = jnp.pad(feat, ((0, b_p - B), (0, res_p - res)))

    resident = nj == 1
    w_pipe = {"pipeline_mode": pl.Buffered(1)} if resident else {}

    vmem_budget = _vmem_footprint(bb, res_p, tngh, att_p, hid_bytes, resident) + (6 << 20)
    vmem_limit = int(max(min(vmem_budget, vmem_cap - (4 << 20)), 16 << 20))

    grid = (b_p // bb, nj)

    out_p, hid_p = pl.pallas_call(
        functools.partial(_attdec_kernel, nj=nj),
        out_shape=(
            jax.ShapeDtypeStruct((b_p, att_p), jnp.float32),     # normalized output
            jax.ShapeDtypeStruct((b_p, ngh_pp), hidden_dtype),   # hidden activations
        ),
        grid_spec=pltpu.PrefetchScalarGridSpec(
            num_scalar_prefetch=0,
            grid=grid,
            in_specs=[
                pl.BlockSpec((bb, res_p), lambda i, j: (i, 0)),              # feat tile (f32)
                pl.BlockSpec((res_p, tngh), lambda i, j: (0, j), **w_pipe),  # w1
                pl.BlockSpec((1, tngh), lambda i, j: (0, j), **w_pipe),      # b1
                pl.BlockSpec((tngh, att_p), lambda i, j: (j, 0), **w_pipe),  # w2
                pl.BlockSpec((1, att_p), lambda i, j: (0, 0),
                             pipeline_mode=pl.Buffered(1)),                  # b2 (grid-constant)
            ],
            out_specs=[
                pl.BlockSpec((bb, att_p), lambda i, j: (i, 0)),   # resident across j (accumulator)
                pl.BlockSpec((bb, tngh), lambda i, j: (i, j)),    # hidden
            ],
        ),
        compiler_params=pltpu.CompilerParams(
            dimension_semantics=("parallel", "arbitrary"),
            vmem_limit_bytes=vmem_limit,
        ),
    )(feat, w1p, b1p, w2p, b2p)

    # Strip padding only when padding was actually added (slices are HBM copies).
    out = out_p if (b_p == B and att_p == att) else out_p[:B, :att]
    hid = hid_p if (b_p == B and ngh_pp == ngh) else hid_p[:B, :ngh]
    return out, hid


def attdec_reference(feat, w1, b1, w2, b2):
    h = feat @ w1 + jnp.reshape(b1, (1, -1))
    h = jnp.where(h > 0, h, 0.2 * h)
    o = h @ w2 + jnp.reshape(b2, (1, -1))
    o = o / jnp.sqrt(jnp.sum(o * o, axis=1, keepdims=True))
    return o, h


if __name__ == "__main__":
    # Small shapes consistent with the module: feat [B, resSize],
    # opt.ngh hidden units, attSize output attributes.
    B, resSize, ngh, attSize = 8, 64, 32, 16

    key = jax.random.PRNGKey(0)
    k_feat, k_w1, k_w2, k_b1, k_b2 = jax.random.split(key, 5)

    feat = jax.random.normal(k_feat, (B, resSize), dtype=jnp.float32)

    # weights_init: Linear weights ~ N(0, 0.02); biases are 0 in the module,
    # but use small nonzero biases here so the bias path is actually exercised.
    w1 = 0.02 * jax.random.normal(k_w1, (resSize, ngh), dtype=jnp.float32)
    b1 = 0.01 * jax.random.normal(k_b1, (1, ngh), dtype=jnp.float32)
    w2 = 0.02 * jax.random.normal(k_w2, (ngh, attSize), dtype=jnp.float32)
    b2 = 0.01 * jax.random.normal(k_b2, (1, attSize), dtype=jnp.float32)

    # One-time weight packing (pad + bf16 cast) outside the hot path.
    w1p, b1p, w2p, b2p, dims = attdec_prepack(w1, b1, w2, b2)

    out, hidden = attdec_forward(feat, w1p, b1p, w2p, b2p, dims=dims)
    out = jax.block_until_ready(out)
    hidden = jax.block_until_ready(hidden)

    ref_out, ref_hidden = attdec_reference(feat, w1, b1, w2, b2)

    assert out.shape == (B, attSize) and hidden.shape == (B, ngh)
    assert out.dtype == jnp.float32

    # bf16 MXU operands (and bf16 hidden store) -> loosened tolerances vs f32 ref.
    assert jnp.allclose(out, ref_out, atol=2e-2, rtol=2e-2), (
        float(jnp.max(jnp.abs(out - ref_out))))
    hidden_f32 = hidden.astype(jnp.float32)
    assert jnp.allclose(hidden_f32, ref_hidden, atol=2e-2, rtol=2e-2), (
        float(jnp.max(jnp.abs(hidden_f32 - ref_hidden))))

    print("KERNEL_OK")
</pallas_src>

<mosaic_0001>
module attributes {stable_mosaic.version = 11 : i64} {
  func.func @_attdec_kernel(%arg0: i32, %arg1: i32, %arg2: memref<16x128xf32, #tpu.memory_space<vmem>>, %arg3: memref<128x128xbf16, #tpu.memory_space<vmem>>, %arg4: memref<1x128xf32, #tpu.memory_space<vmem>>, %arg5: memref<128x128xbf16, #tpu.memory_space<vmem>>, %arg6: memref<1x128xf32, #tpu.memory_space<vmem>>, %arg7: memref<16x128xf32, #tpu.memory_space<vmem>>, %arg8: memref<16x128xbf16, #tpu.memory_space<vmem>>) attributes {dimension_semantics = [#tpu.dimension_semantics<parallel>, #tpu.dimension_semantics<arbitrary>], iteration_bounds = array<i64: 1, 1>, scalar_prefetch = 0 : i64, scratch_operands = 0 : i64, tpu.core_type = #tpu.core_type<tc>, window_params = [{transform_indices = @transform_0, window_bounds = array<i64: 16, 128>}, {pipeline_mode = #tpu.pipeline_mode<synchronous>, transform_indices = @transform_1, window_bounds = array<i64: 128, 128>}, {pipeline_mode = #tpu.pipeline_mode<synchronous>, transform_indices = @transform_2, window_bounds = array<i64: 1, 128>}, {pipeline_mode = #tpu.pipeline_mode<synchronous>, transform_indices = @transform_3, window_bounds = array<i64: 128, 128>}, {pipeline_mode = #tpu.pipeline_mode<synchronous>, transform_indices = @transform_4, window_bounds = array<i64: 1, 128>}, {transform_indices = @transform_5, window_bounds = array<i64: 16, 128>}, {transform_indices = @transform_6, window_bounds = array<i64: 16, 128>}]} {
    %c0 = arith.constant 0 : index
    %c0_0 = arith.constant 0 : index
    %0 = vector.load %arg2[%c0, %c0_0] : memref<16x128xf32, #tpu.memory_space<vmem>>, vector<16x128xf32>
    %1 = arith.truncf %0 : vector<16x128xf32> to vector<16x128xbf16>
    %c0_1 = arith.constant 0 : index
    %c0_2 = arith.constant 0 : index
    %2 = vector.load %arg3[%c0_1, %c0_2] : memref<128x128xbf16, #tpu.memory_space<vmem>>, vector<128x128xbf16>
    %cst = arith.constant dense<0.000000e+00> : vector<16x128xf32>
    %3 = tpu.matmul %1, %2, %cst {dimension_numbers = #tpu.dot_dimension_numbers<[1], [0], [0], [1], [0, 0, 1, 1], [], []>} : vector<16x128xbf16>, vector<128x128xbf16>, vector<16x128xf32> -> vector<16x128xf32>
    %c0_3 = arith.constant 0 : index
    %c0_4 = arith.constant 0 : index
    %4 = vector.load %arg4[%c0_3, %c0_4] : memref<1x128xf32, #tpu.memory_space<vmem>>, vector<1x128xf32>
    %5 = vector.broadcast %4 : vector<1x128xf32> to vector<16x128xf32>
    %6 = arith.addf %3, %5 : vector<16x128xf32>
    %cst_5 = arith.constant 0.000000e+00 : f32
    %7 = vector.broadcast %cst_5 : f32 to vector<16x128xf32>
    %8 = arith.cmpf ogt, %6, %7 : vector<16x128xf32>
    %cst_6 = arith.constant 2.000000e-01 : f32
    %9 = vector.broadcast %cst_6 : f32 to vector<16x128xf32>
    %10 = arith.mulf %9, %6 : vector<16x128xf32>
    %11 = arith.select %8, %6, %10 : vector<16x128xi1>, vector<16x128xf32>
    %12 = arith.truncf %11 : vector<16x128xf32> to vector<16x128xbf16>
    %c0_7 = arith.constant 0 : index
    %c0_8 = arith.constant 0 : index
    %13 = vector.load %arg8[%c0_7, %c0_8] : memref<16x128xbf16, #tpu.memory_space<vmem>>, vector<16x128xbf16>
    tpu.vector_store %arg8[%c0_7, %c0_8], %12 {strides = array<i32>} : memref<16x128xbf16, #tpu.memory_space<vmem>>, vector<16x128xbf16>,
    %c0_9 = arith.constant 0 : index
    %c0_10 = arith.constant 0 : index
    %14 = vector.load %arg5[%c0_9, %c0_10] : memref<128x128xbf16, #tpu.memory_space<vmem>>, vector<128x128xbf16>
    %cst_11 = arith.constant dense<0.000000e+00> : vector<16x128xf32>
    %15 = tpu.matmul %12, %14, %cst_11 {dimension_numbers = #tpu.dot_dimension_numbers<[1], [0], [0], [1], [0, 0, 1, 1], [], []>} : vector<16x128xbf16>, vector<128x128xbf16>, vector<16x128xf32> -> vector<16x128xf32>
    %c0_12 = arith.constant 0 : index
    %c0_13 = arith.constant 0 : index
    %16 = vector.load %arg6[%c0_12, %c0_13] : memref<1x128xf32, #tpu.memory_space<vmem>>, vector<1x128xf32>
    %17 = vector.broadcast %16 : vector<1x128xf32> to vector<16x128xf32>
    %18 = arith.addf %15, %17 : vector<16x128xf32>
    %19 = arith.mulf %18, %18 : vector<16x128xf32>
    %cst_14 = arith.constant dense<0.000000e+00> : vector<16xf32>
    %20 = vector.multi_reduction <add>, %19, %cst_14 [1] : vector<16x128xf32> to vector<16xf32>
    %21 = vector.shape_cast %20 : vector<16xf32> to vector<16x1xf32>
    %22 = math.rsqrt %21 : vector<16x1xf32>
    %23 = vector.broadcast %22 : vector<16x1xf32> to vector<16x128xf32>
    %24 = arith.mulf %18, %23 : vector<16x128xf32>
    %c0_15 = arith.constant 0 : index
    %c0_16 = arith.constant 0 : index
    %25 = vector.load %arg7[%c0_15, %c0_16] : memref<16x128xf32, #tpu.memory_space<vmem>>, vector<16x128xf32>
    tpu.vector_store %arg7[%c0_15, %c0_16], %24 {strides = array<i32>} : memref<16x128xf32, #tpu.memory_space<vmem>>, vector<16x128xf32>,
    return
  }
  func.func @transform_0(%arg0: i32, %arg1: i32) -> (i32, i32) {
    %c0_i32 = arith.constant 0 : i32
    %c0_i32_0 = arith.constant 0 : i32
    return %arg0, %c0_i32 : i32, i32
  }
  func.func @transform_1(%arg0: i32, %arg1: i32) -> (i32, i32) {
    %c0_i32 = arith.constant 0 : i32
    %c0_i32_0 = arith.constant 0 : i32
    return %c0_i32, %arg1 : i32, i32
  }
  func.func @transform_2(%arg0: i32, %arg1: i32) -> (i32, i32) {
    %c0_i32 = arith.constant 0 : i32
    %c0_i32_0 = arith.constant 0 : i32
    return %c0_i32, %arg1 : i32, i32
  }
  func.func @transform_3(%arg0: i32, %arg1: i32) -> (i32, i32) {
    %c0_i32 = arith.constant 0 : i32
    %c0_i32_0 = arith.constant 0 : i32
    return %arg1, %c0_i32 : i32, i32
  }
  func.func @transform_4(%arg0: i32, %arg1: i32) -> (i32, i32) {
    %c0_i32 = arith.constant 0 : i32
    %c0_i32_0 = arith.constant 0 : i32
    %c0_i32_1 = arith.constant 0 : i32
    return %c0_i32, %c0_i32_0 : i32, i32
  }
  func.func @transform_5(%arg0: i32, %arg1: i32) -> (i32, i32) {
    %c0_i32 = arith.constant 0 : i32
    %c0_i32_0 = arith.constant 0 : i32
    return %arg0, %c0_i32 : i32, i32
  }
  func.func @transform_6(%arg0: i32, %arg1: i32) -> (i32, i32) {
    %c0_i32 = arith.constant 0 : i32
    return %arg0, %arg1 : i32, i32
  }
}

</mosaic_0001>

<llo_original>
// kernel: attdec_forward.1
$region0: #{attdec_forward.1}
  #allocation0 [shape = 'u32[]', space=smem, size = 0x4, offset = 0x4, fixed_abs, tag = 'smem constant byte address 0x4 - core index']
  #allocation1 [shape = 'u32[144,128]{1,0:T(1,128)}', space=vmem, size = 0x12000, scoped, tag = 'internal scratch']
  %s0 = inlined_call_operand.vmem [shape: f32[16,128], index: 0, kind: input, shape index: {}]
  %s1 = inlined_call_operand.hbm [shape: bf16[128,128], index: 1, kind: input, shape index: {}]
  %s2 = inlined_call_operand.vmem [shape: f32[1,128], index: 2, kind: input, shape index: {}]
  %s3 = inlined_call_operand.hbm [shape: bf16[128,128], index: 3, kind: input, shape index: {}]
  %s4 = inlined_call_operand.vmem [shape: f32[1,128], index: 4, kind: input, shape index: {}]
  %s5 = inlined_call_operand.vmem [shape: f32[16,128], index: 5, kind: output, shape index: {0}]
  %s6 = inlined_call_operand.vmem [shape: bf16[16,128], index: 6, kind: output, shape index: {1}]
  %7 = xla_tuple %s5, %s6
  %s8 = sld [smem:[#allocation0]]
  $region46: #{attdec_forward.1} parent=0
    _
  %s10 = ssub.s32 1, %s8
  %s11 = scalar_select 0, %s10, %s8
  $region1: #{attdec_forward.1} parent=0
    #allocation2 [shape = 'u8[32768]{0}', space=vmem, size = 0x8000, scoped, tag = 'input window, operand 1, single buffered']
    #allocation3 [shape = 's32[1]{0}', space=sflag, size = 0x4, scoped, tag = 'scoped memory for attdec_forward.1']
    #allocation4 [shape = 'u8[32768]{0}', space=vmem, size = 0x8000, scoped, tag = 'input window, operand 3, single buffered']
    #allocation5 [shape = 's32[1]{0}', space=sflag, size = 0x4, scoped, tag = 'scoped memory for attdec_forward.1']
    %12 = vsyncpa [#allocation3], 0
    %13 = vsyncpa [#allocation5], 0
    // Predicated region
    $region2: #{attdec_forward.1} parent=1 // pred_check
      _
    $region3: #{attdec_forward.1} parent=1 // pred_check_branch
      %15 = sbr.rel (0) target = $region5
    $region4: #{attdec_forward.1} parent=1 // pred_region
      _
    $region5: #{attdec_forward.1} parent=1 // pred_fallthru
      _
    // Predicated region
    $region6: #{attdec_forward.1} parent=1 // pred_check
      _
    $region7: #{attdec_forward.1} parent=1 // pred_check_branch
      %17 = sbr.rel (0) target = $region9
    $region8: #{attdec_forward.1} parent=1 // pred_region
      %s19 = ssub.s32 1024, 1024
      %20 = vsyncadd [#allocation3], %s19
      %s21 = sshll.u32 [#allocation2], 4
      %s22 = int_to_ptr.vmem [resolvable:$true] %s21
      %27 = dma.hbm_to_vmem [thread:$0]  %s1, 1024, %s22, [#allocation3], 64, 64, 4
    $region9: #{attdec_forward.1} parent=1 // pred_fallthru
      _
    // Predicated region
    $region10: #{attdec_forward.1} parent=1 // pred_check
      _
    $region11: #{attdec_forward.1} parent=1 // pred_check_branch
      %29 = sbr.rel (0) target = $region13
    $region12: #{attdec_forward.1} parent=1 // pred_region
      _
    $region13: #{attdec_forward.1} parent=1 // pred_fallthru
      _
    // Predicated region
    $region14: #{attdec_forward.1} parent=1 // pred_check
      _
    $region15: #{attdec_forward.1} parent=1 // pred_check_branch
      %31 = sbr.rel (0) target = $region17
    $region16: #{attdec_forward.1} parent=1 // pred_region
      %s33 = ssub.s32 1024, 1024
      %34 = vsyncadd [#allocation5], %s33
      %s35 = sshll.u32 [#allocation4], 4
      %s36 = int_to_ptr.vmem [resolvable:$true] %s35
      %41 = dma.hbm_to_vmem [thread:$0]  %s3, 1024, %s36, [#allocation5], 64, 64, 4
    $region17: #{attdec_forward.1} parent=1 // pred_fallthru
      _
    // Predicated region
    $region18: #{attdec_forward.1} parent=1 // pred_check
      _
    $region19: #{attdec_forward.1} parent=1 // pred_check_branch
      %43 = sbr.rel (0) target = $region21
    $region20: #{attdec_forward.1} parent=1 // pred_region
      _
    $region21: #{attdec_forward.1} parent=1 // pred_fallthru
      _
    // Predicated region
    $region22: #{attdec_forward.1} parent=1 // pred_check
      _
    $region23: #{attdec_forward.1} parent=1 // pred_check_branch
      %45 = sbr.rel (0) target = $region25
    $region24: #{attdec_forward.1} parent=1 // pred_region
      %46 = dma.done [#allocation3], 1024
    $region25: #{attdec_forward.1} parent=1 // pred_fallthru
      _
    // Predicated region
    $region26: #{attdec_forward.1} parent=1 // pred_check
      _
    $region27: #{attdec_forward.1} parent=1 // pred_check_branch
      %48 = sbr.rel (0) target = $region29
    $region28: #{attdec_forward.1} parent=1 // pred_region
      %49 = dma.done [#allocation5], 1024
    $region29: #{attdec_forward.1} parent=1 // pred_fallthru
      _
    %v51 = vld [vmem:[%s0] sm:$0xff]
    %v52 = vld [vmem:[%s0 + $0x8] sm:$0xff]
    %v53 = vpack.c.bf16 %v52, %v51
    %v54 = vld [vmem:[#allocation2] sm:$0xf]
    %v55 = vld [vmem:[#allocation2 + $0x4] sm:$0xf]
    %v56 = vld [vmem:[#allocation2 + $0x8] sm:$0xf]
    %v57 = vld [vmem:[#allocation2 + $0xc] sm:$0xf]
    %v58 = vld [vmem:[#allocation2 + $0x10] sm:$0xf]
    %v59 = vld [vmem:[#allocation2 + $0x14] sm:$0xf]
    %v60 = vld [vmem:[#allocation2 + $0x18] sm:$0xf]
    %v61 = vld [vmem:[#allocation2 + $0x1c] sm:$0xf]
    %v62 = vld [vmem:[#allocation2 + $0x20] sm:$0xf]
    %v63 = vld [vmem:[#allocation2 + $0x24] sm:$0xf]
    %v64 = vld [vmem:[#allocation2 + $0x28] sm:$0xf]
    %v65 = vld [vmem:[#allocation2 + $0x2c] sm:$0xf]
    %v66 = vld [vmem:[#allocation2 + $0x30] sm:$0xf]
    %v67 = vld [vmem:[#allocation2 + $0x34] sm:$0xf]
    %v68 = vld [vmem:[#allocation2 + $0x38] sm:$0xf]
    %v69 = vld [vmem:[#allocation2 + $0x3c] sm:$0xf]
    %v70 = vld [vmem:[%s2] sm:$0x1]
    %v72 = vlaneseq
    %v73 = vshrl.u32 %v72, 7
    %v74 = vsub.s32 0, %v73
    %v75 = vrot.slane %v70, %v74
    %v93 = vunpack.c.l.b16 %v54
    %v94 = vunpack.c.l.b16 %v55
    %v95 = vunpack.c.l.b16 %v56
    %v96 = vunpack.c.l.b16 %v57
    %v97 = vunpack.c.l.b16 %v58
    %v98 = vunpack.c.l.b16 %v59
    %v99 = vunpack.c.l.b16 %v60
    %v100 = vunpack.c.l.b16 %v61
    %v101 = vunpack.c.l.b16 %v62
    %v102 = vunpack.c.l.b16 %v63
    %v103 = vunpack.c.l.b16 %v64
    %v104 = vunpack.c.l.b16 %v65
    %v105 = vunpack.c.l.b16 %v66
    %v106 = vunpack.c.l.b16 %v67
    %v107 = vunpack.c.l.b16 %v68
    %v108 = vunpack.c.l.b16 %v69
    %v109 = vpack.c.b16 %v94, %v93
    %v110 = vpack.c.b16 %v96, %v95
    %v111 = vpack.c.b16 %v98, %v97
    %v112 = vpack.c.b16 %v100, %v99
    %v113 = vpack.c.b16 %v102, %v101
    %v114 = vpack.c.b16 %v104, %v103
    %v115 = vpack.c.b16 %v106, %v105
    %v116 = vpack.c.b16 %v108, %v107
    %125 = vmatprep.subr.bf16.mxu0 0
    %126 = vmatpush1.bf16.msra.mxu0 %v116
    %127 = vmatprep.subr.bf16.mxu0 0
    %128 = vmatpush1.bf16.msra.mxu0 %v115
    %129 = vmatprep.subr.bf16.mxu0 0
    %130 = vmatpush1.bf16.msra.mxu0 %v114
    %131 = vmatprep.subr.bf16.mxu0 0
    %132 = vmatpush1.bf16.msra.mxu0 %v113
    %133 = vmatprep.subr.bf16.mxu0 0
    %134 = vmatpush1.bf16.msra.mxu0 %v112
    %135 = vmatprep.subr.bf16.mxu0 0
    %136 = vmatpush1.bf16.msra.mxu0 %v111
    %137 = vmatprep.subr.bf16.mxu0 0
    %138 = vmatpush1.bf16.msra.mxu0 %v110
    %139 = vmatprep.subr.bf16.mxu0 0
    %140 = vmatpush1.bf16.msra.mxu0 %v109
    %141 = vmatprep.subr.bf16.mxu0 0
    %142 = vmatpush2.bf16.msra.mxu0 0
    %143 = vmatprep.subr.bf16.mxu0 0
    %144 = vmatpush2.bf16.msra.mxu0 0
    %145 = vmatprep.subr.bf16.mxu0 0
    %146 = vmatpush2.bf16.msra.mxu0 0
    %147 = vmatprep.subr.bf16.mxu0 0
    %148 = vmatpush2.bf16.msra.mxu0 0
    %149 = vmatprep.subr.bf16.mxu0 0
    %150 = vmatpush2.bf16.msra.mxu0 0
    %151 = vmatprep.subr.bf16.mxu0 0
    %152 = vmatpush2.bf16.msra.mxu0 0
    %153 = vmatprep.subr.bf16.mxu0 0
    %154 = vmatpush2.bf16.msra.mxu0 0
    %155 = vmatprep.subr.bf16.mxu0 0
    %156 = vmatpush2.bf16.msra.mxu0 0
    %157 = vmatprep.mubr.bf16.mxu0 0
    %158 = vmatmul.mubr.bf16.gmra.mxu0 %v53
    %v159 = vpop.f32.mrf.mxu0
    %v160 = vadd.f32 %v75, %v159
    %v161 = vpop.f32.mrf.mxu0
    %v162 = vpop.f32.mrf.mxu0
    %v163 = vadd.f32 %v75, %v162
    %v164 = vpop.f32.mrf.mxu0
    %165 = vdwg.mxu0
    %vm166 = vcmp.gt.f32.partialorder %v160, 0.0
    %vm167 = vcmp.gt.f32.partialorder %v163, 0.0
    %v168 = vmul.f32 %v160, 0.2
    %v169 = vmul.f32 %v163, 0.2
    %v170 = vsel %vm166, %v160, %v168
    %v171 = vsel %vm167, %v163, %v169
    %v172 = vpack.c.bf16 %v171, %v170
    %v174 = vunpack.c.l.b16 %v172
    %v175 = vunpack.c.h.b16 %v172
    %v176 = vpack.c.b16 %v174, %v174
    %v177 = vpack.c.b16 %v175, %v175
    %180 = vst [vmem:[%s6] sm:$0xf] %v176
    %181 = vst [vmem:[%s6 + $0x4] sm:$0xf] %v177
    %v182 = vld [vmem:[#allocation4] sm:$0xf]
    %v183 = vld [vmem:[#allocation4 + $0x4] sm:$0xf]
    %v184 = vld [vmem:[#allocation4 + $0x8] sm:$0xf]
    %v185 = vld [vmem:[#allocation4 + $0xc] sm:$0xf]
    %v186 = vld [vmem:[#allocation4 + $0x10] sm:$0xf]
    %v187 = vld [vmem:[#allocation4 + $0x14] sm:$0xf]
    %v188 = vld [vmem:[#allocation4 + $0x18] sm:$0xf]
    %v189 = vld [vmem:[#allocation4 + $0x1c] sm:$0xf]
    %v190 = vld [vmem:[#allocation4 + $0x20] sm:$0xf]
    %v191 = vld [vmem:[#allocation4 + $0x24] sm:$0xf]
    %v192 = vld [vmem:[#allocation4 + $0x28] sm:$0xf]
    %v193 = vld [vmem:[#allocation4 + $0x2c] sm:$0xf]
    %v194 = vld [vmem:[#allocation4 + $0x30] sm:$0xf]
    %v195 = vld [vmem:[#allocation4 + $0x34] sm:$0xf]
    %v196 = vld [vmem:[#allocation4 + $0x38] sm:$0xf]
    %v197 = vld [vmem:[#allocation4 + $0x3c] sm:$0xf]
    %v198 = vld [vmem:[%s4] sm:$0x1]
    %v200 = vlaneseq
    %v201 = vshrl.u32 %v200, 7
    %v202 = vsub.s32 0, %v201
    %v203 = vrot.slane %v198, %v202
    %v221 = vunpack.c.l.b16 %v182
    %v222 = vunpack.c.l.b16 %v183
    %v223 = vunpack.c.l.b16 %v184
    %v224 = vunpack.c.l.b16 %v185
    %v225 = vunpack.c.l.b16 %v186
    %v226 = vunpack.c.l.b16 %v187
    %v227 = vunpack.c.l.b16 %v188
    %v228 = vunpack.c.l.b16 %v189
    %v229 = vunpack.c.l.b16 %v190
    %v230 = vunpack.c.l.b16 %v191
    %v231 = vunpack.c.l.b16 %v192
    %v232 = vunpack.c.l.b16 %v193
    %v233 = vunpack.c.l.b16 %v194
    %v234 = vunpack.c.l.b16 %v195
    %v235 = vunpack.c.l.b16 %v196
    %v236 = vunpack.c.l.b16 %v197
    %v237 = vpack.c.b16 %v222, %v221
    %v238 = vpack.c.b16 %v224, %v223
    %v239 = vpack.c.b16 %v226, %v225
    %v240 = vpack.c.b16 %v228, %v227
    %v241 = vpack.c.b16 %v230, %v229
    %v242 = vpack.c.b16 %v232, %v231
    %v243 = vpack.c.b16 %v234, %v233
    %v244 = vpack.c.b16 %v236, %v235
    %253 = vmatprep.subr.bf16.mxu0 0
    %254 = vmatpush1.bf16.msra.mxu0 %v244
    %255 = vmatprep.subr.bf16.mxu0 0
    %256 = vmatpush1.bf16.msra.mxu0 %v243
    %257 = vmatprep.subr.bf16.mxu0 0
    %258 = vmatpush1.bf16.msra.mxu0 %v242
    %259 = vmatprep.subr.bf16.mxu0 0
    %260 = vmatpush1.bf16.msra.mxu0 %v241
    %261 = vmatprep.subr.bf16.mxu0 0
    %262 = vmatpush1.bf16.msra.mxu0 %v240
    %263 = vmatprep.subr.bf16.mxu0 0
    %264 = vmatpush1.bf16.msra.mxu0 %v239
    %265 = vmatprep.subr.bf16.mxu0 0
    %266 = vmatpush1.bf16.msra.mxu0 %v238
    %267 = vmatprep.subr.bf16.mxu0 0
    %268 = vmatpush1.bf16.msra.mxu0 %v237
    %269 = vmatprep.subr.bf16.mxu0 0
    %270 = vmatpush2.bf16.msra.mxu0 0
    %271 = vmatprep.subr.bf16.mxu0 0
    %272 = vmatpush2.bf16.msra.mxu0 0
    %273 = vmatprep.subr.bf16.mxu0 0
    %274 = vmatpush2.bf16.msra.mxu0 0
    %275 = vmatprep.subr.bf16.mxu0 0
    %276 = vmatpush2.bf16.msra.mxu0 0
    %277 = vmatprep.subr.bf16.mxu0 0
    %278 = vmatpush2.bf16.msra.mxu0 0
    %279 = vmatprep.subr.bf16.mxu0 0
    %280 = vmatpush2.bf16.msra.mxu0 0
    %281 = vmatprep.subr.bf16.mxu0 0
    %282 = vmatpush2.bf16.msra.mxu0 0
    %283 = vmatprep.subr.bf16.mxu0 0
    %284 = vmatpush2.bf16.msra.mxu0 0
    %285 = vmatprep.mubr.bf16.mxu0 0
    %286 = vmatmul.mubr.bf16.gmra.mxu0 %v172
    %v287 = vpop.f32.mrf.mxu0
    %v288 = vadd.f32 %v203, %v287
    %v289 = vpop.f32.mrf.mxu0
    %v290 = vpop.f32.mrf.mxu0
    %v291 = vadd.f32 %v203, %v290
    %v292 = vpop.f32.mrf.mxu0
    %293 = vdwg.mxu0
    %v294 = vmul.f32 %v288, %v288
    %v295 = vmul.f32 %v291, %v291
    %296 = vadd.xlane.f32.xlu0 %v294
    %v297 = vpop.xlane.xlu0 %296
    %298 = vadd.xlane.f32.xlu0 %v295
    %v299 = vpop.xlane.xlu0 %298
    %v300 = vrsqrt.pop %v297
    %v301 = vrsqrt.pop %v299
    %v302 = vmul.f32 %v288, %v300
    %v303 = vmul.f32 %v291, %v301
    %304 = vst [vmem:[%s5] sm:$0xff] %v302
    %305 = vst [vmem:[%s5 + $0x8] sm:$0xff] %v303
    // Predicated region
    $region30: #{attdec_forward.1} parent=1 // pred_check
      _
    $region31: #{attdec_forward.1} parent=1 // pred_check_branch
      %307 = sbr.rel (0) target = $region33
    $region32: #{attdec_forward.1} parent=1 // pred_region
      _
    $region33: #{attdec_forward.1} parent=1 // pred_fallthru
      _
    // Predicated region
    $region34: #{attdec_forward.1} parent=1 // pred_check
      _
    $region35: #{attdec_forward.1} parent=1 // pred_check_branch
      %309 = sbr.rel (0) target = $region37
    $region36: #{attdec_forward.1} parent=1 // pred_region
      _
    $region37: #{attdec_forward.1} parent=1 // pred_fallthru
      _
    // Predicated region
    $region38: #{attdec_forward.1} parent=1 // pred_check
      _
    $region39: #{attdec_forward.1} parent=1 // pred_check_branch
      %311 = sbr.rel (0) target = $region41
    $region40: #{attdec_forward.1} parent=1 // pred_region
      _
    $region41: #{attdec_forward.1} parent=1 // pred_fallthru
      _
    // Predicated region
    $region42: #{attdec_forward.1} parent=1 // pred_check
      _
    $region43: #{attdec_forward.1} parent=1 // pred_check_branch
      %313 = sbr.rel (0) target = $region45
    $region44: #{attdec_forward.1} parent=1 // pred_region
      _
    $region45: #{attdec_forward.1} parent=1 // pred_fallthru
      _
    %314 = vsyncpa [#allocation3], 1
    %315 = vsyncpa [#allocation5], 1

</llo_original>
